<compile_context>
chip_gen: v6e
topology: v6e:2x2x1
jax: 0.10.0
libtpu: 0.0.40
codegen_flags: <defaults>
</compile_context>

<pallas_src>
import functools

import jax
import jax.numpy as jnp
from jax.experimental import pallas as pl
from jax.experimental.pallas import tpu as pltpu


def _round_up(x, m):
    return ((x + m - 1) // m) * m


def _encoder_kernel(x_ref, w1_ref, w2_ref, c_ref, o_ref, *, eps):
    # x_ref:  (TM, D_in)  node-feature tile (f32 or bf16)
    # w1_ref: (D_in, H)   bf16 first linear weight (resident)
    # w2_ref: (H, H)      bf16 second linear weight (resident)
    # c_ref:  (4, H)      f32 fused constants: [b1; b2; gamma; beta]
    # o_ref:  (TM, H)     output tile (f32 or bf16)
    c = c_ref[...]
    b1 = c[0:1, :]
    b2 = c[1:2, :]
    gamma = c[2:3, :]
    beta = c[3:4, :]

    # Linear 1: bf16 MXU matmul with f32 accumulation; bias + ReLU in f32.
    # (cast is a no-op if the caller already streams bf16 node features)
    x = x_ref[...].astype(jnp.bfloat16)
    h = jnp.dot(x, w1_ref[...], preferred_element_type=jnp.float32) + b1
    h = jnp.maximum(h, 0.0)

    # Linear 2: bf16 MXU matmul with f32 accumulation; bias in f32.
    y = jnp.dot(h.astype(jnp.bfloat16), w2_ref[...],
                preferred_element_type=jnp.float32) + b2

    # Single-pass LayerNorm over the feature dim (f32):
    #   one pair of cross-lane reductions instead of two, var clamped at 0
    #   to guard against cancellation in E[y^2] - mean^2.
    inv_h = 1.0 / y.shape[-1]
    mean = jnp.sum(y, axis=-1, keepdims=True) * inv_h
    ex2 = jnp.sum(y * y, axis=-1, keepdims=True) * inv_h
    var = jnp.maximum(ex2 - mean * mean, 0.0)
    y_hat = (y - mean) * jax.lax.rsqrt(var + eps)
    o_ref[...] = (y_hat * gamma + beta).astype(o_ref.dtype)


def _choose_tile(n_pad8, tile_m):
    """Row-tile size: multiple of 8, capped at tile_m, and arranged so there
    are >= 2 (balanced) grid steps whenever possible so v7x's two TensorCores
    both get work under dimension_semantics=("parallel",)."""
    num_blocks = pl.cdiv(n_pad8, tile_m)
    if n_pad8 >= 16:
        num_blocks = max(num_blocks, 2)
    return _round_up(pl.cdiv(n_pad8, num_blocks), 8)


def encoder_forward(node_attr, params, *, tile_m=512, eps=1e-5,
                    out_dtype=jnp.float32):
    """node_attr: [N, D_in] (f32 or bf16) -> [N, H] node latents in out_dtype."""
    w1, b1, w2, b2, gamma, beta = params
    N, D_in = node_attr.shape
    H = w2.shape[1]

    # Pad only to the 8-sublane requirement (and only if actually needed);
    # the ragged last grid block is clipped by Pallas on the output write.
    n_pad8 = _round_up(N, 8)
    x = node_attr
    if n_pad8 != N:
        x = jnp.pad(x, ((0, n_pad8 - N), (0, 0)))

    tm = _choose_tile(n_pad8, tile_m)
    grid = (pl.cdiv(n_pad8, tm),)

    # bf16 weights: halves weight DMA and hits the MXU bf16 fast path.
    w1_bf = w1.astype(jnp.bfloat16)
    w2_bf = w2.astype(jnp.bfloat16)
    # Fused small constants: [b1; b2; gamma; beta] -> (4, H) f32.
    consts = jnp.concatenate([b1, b2, gamma, beta], axis=0).astype(jnp.float32)

    kernel = functools.partial(_encoder_kernel, eps=eps)
    full = lambda i: (0, 0)

    out = pl.pallas_call(
        kernel,
        out_shape=jax.ShapeDtypeStruct((n_pad8, H), out_dtype),
        grid_spec=pltpu.PrefetchScalarGridSpec(
            num_scalar_prefetch=0,
            grid=grid,
            in_specs=[
                pl.BlockSpec((tm, D_in), lambda i: (i, 0)),  # x tile (ragged-ok)
                pl.BlockSpec((D_in, H), full),               # W1 (bf16, resident)
                pl.BlockSpec((H, H), full),                  # W2 (bf16, resident)
                pl.BlockSpec((4, H), full),                  # [b1; b2; gamma; beta]
            ],
            out_specs=pl.BlockSpec((tm, H), lambda i: (i, 0)),
        ),
        compiler_params=pltpu.CompilerParams(
            dimension_semantics=("parallel",)),
    )(x, w1_bf, w2_bf, consts)

    if n_pad8 != N:
        out = out[:N]
    return out


def init_params(key, node_input_size, hidden_size):
    """Deterministic synthetic parameter init (shapes match nn.Linear/LayerNorm)."""
    k1, k2, k3, k4 = jax.random.split(key, 4)
    s1 = 1.0 / jnp.sqrt(node_input_size)
    s2 = 1.0 / jnp.sqrt(hidden_size)
    w1 = jax.random.uniform(k1, (node_input_size, hidden_size), jnp.float32, -s1, s1)
    b1 = jax.random.uniform(k2, (1, hidden_size), jnp.float32, -s1, s1)
    w2 = jax.random.uniform(k3, (hidden_size, hidden_size), jnp.float32, -s2, s2)
    b2 = jax.random.uniform(k4, (1, hidden_size), jnp.float32, -s2, s2)
    gamma = jnp.ones((1, hidden_size), jnp.float32)   # LayerNorm weight
    beta = jnp.zeros((1, hidden_size), jnp.float32)   # LayerNorm bias
    return (w1, b1, w2, b2, gamma, beta)


def reference_forward(node_attr, params, eps=1e-5):
    """Pure-JAX f32 reference (matches the torch module's math)."""
    w1, b1, w2, b2, gamma, beta = params
    h = jnp.maximum(node_attr @ w1 + b1, 0.0)
    y = h @ w2 + b2
    mean = jnp.mean(y, axis=-1, keepdims=True)
    var = jnp.mean((y - mean) ** 2, axis=-1, keepdims=True)
    return (y - mean) * jax.lax.rsqrt(var + eps) * gamma + beta


if __name__ == "__main__":
    NODE_INPUT_SIZE = 128
    HIDDEN_SIZE = 128

    key = jax.random.PRNGKey(0)
    k_x, k_x2, k_p = jax.random.split(key, 3)
    params = init_params(k_p, NODE_INPUT_SIZE, HIDDEN_SIZE)

    # Case 1: tiny graph (matches module defaults), multiple of 8 rows.
    N1 = 16
    node_attr = jax.random.normal(k_x, (N1, NODE_INPUT_SIZE), jnp.float32)
    # edge_index is pass-through in the original forward (no compute on it).
    edge_index = jnp.array([[0, 1, 2, 3], [1, 2, 3, 0]], dtype=jnp.int32)

    node_latent = encoder_forward(node_attr, params)
    node_latent = jax.block_until_ready(node_latent)
    ref = reference_forward(node_attr, params)
    assert node_latent.shape == (N1, HIDDEN_SIZE)
    # bf16 matmul inputs (f32 accumulation) -> looser tolerance vs. f32 reference.
    assert jnp.allclose(node_latent, ref, atol=5e-2, rtol=5e-2), "mismatch (case 1)"

    # Case 2: N not a multiple of 8 and not a multiple of the tile -> exercises
    # the 8-row pad + ragged (clipped) last grid block path.
    N2 = 300
    node_attr2 = jax.random.normal(k_x2, (N2, NODE_INPUT_SIZE), jnp.float32)
    node_latent2 = encoder_forward(node_attr2, params, tile_m=128)
    node_latent2 = jax.block_until_ready(node_latent2)
    ref2 = reference_forward(node_attr2, params)
    assert node_latent2.shape == (N2, HIDDEN_SIZE)
    assert jnp.allclose(node_latent2, ref2, atol=5e-2, rtol=5e-2), "mismatch (case 2)"

    # Output "graph": (x=node_latent, edge_index=edge_index) — edge_index untouched.
    _ = edge_index

    print("KERNEL_OK")
</pallas_src>

<mosaic_0001>
module attributes {stable_mosaic.version = 11 : i64} {
  func.func @_encoder_kernel(%arg0: i32, %arg1: memref<8x128xf32, #tpu.memory_space<vmem>>, %arg2: memref<128x128xbf16, #tpu.memory_space<vmem>>, %arg3: memref<128x128xbf16, #tpu.memory_space<vmem>>, %arg4: memref<4x128xf32, #tpu.memory_space<vmem>>, %arg5: memref<8x128xf32, #tpu.memory_space<vmem>>) attributes {dimension_semantics = [#tpu.dimension_semantics<parallel>], iteration_bounds = array<i64: 2>, scalar_prefetch = 0 : i64, scratch_operands = 0 : i64, tpu.core_type = #tpu.core_type<tc>, window_params = [{transform_indices = @transform_0, window_bounds = array<i64: 8, 128>}, {pipeline_mode = #tpu.pipeline_mode<synchronous>, transform_indices = @transform_1, window_bounds = array<i64: 128, 128>}, {pipeline_mode = #tpu.pipeline_mode<synchronous>, transform_indices = @transform_2, window_bounds = array<i64: 128, 128>}, {pipeline_mode = #tpu.pipeline_mode<synchronous>, transform_indices = @transform_3, window_bounds = array<i64: 4, 128>}, {transform_indices = @transform_4, window_bounds = array<i64: 8, 128>}]} {
    %c0 = arith.constant 0 : index
    %c0_0 = arith.constant 0 : index
    %0 = vector.load %arg4[%c0, %c0_0] : memref<4x128xf32, #tpu.memory_space<vmem>>, vector<4x128xf32>
    %1 = vector.extract_strided_slice %0 {offsets = [0, 0], sizes = [1, 128], strides = [1, 1]} : vector<4x128xf32> to vector<1x128xf32>
    %2 = vector.extract_strided_slice %0 {offsets = [1, 0], sizes = [1, 128], strides = [1, 1]} : vector<4x128xf32> to vector<1x128xf32>
    %3 = vector.extract_strided_slice %0 {offsets = [2, 0], sizes = [1, 128], strides = [1, 1]} : vector<4x128xf32> to vector<1x128xf32>
    %4 = vector.extract_strided_slice %0 {offsets = [3, 0], sizes = [1, 128], strides = [1, 1]} : vector<4x128xf32> to vector<1x128xf32>
    %c0_1 = arith.constant 0 : index
    %c0_2 = arith.constant 0 : index
    %5 = vector.load %arg1[%c0_1, %c0_2] : memref<8x128xf32, #tpu.memory_space<vmem>>, vector<8x128xf32>
    %6 = arith.truncf %5 : vector<8x128xf32> to vector<8x128xbf16>
    %c0_3 = arith.constant 0 : index
    %c0_4 = arith.constant 0 : index
    %7 = vector.load %arg2[%c0_3, %c0_4] : memref<128x128xbf16, #tpu.memory_space<vmem>>, vector<128x128xbf16>
    %cst = arith.constant dense<0.000000e+00> : vector<8x128xf32>
    %8 = tpu.matmul %6, %7, %cst {dimension_numbers = #tpu.dot_dimension_numbers<[1], [0], [0], [1], [0, 0, 1, 1], [], []>} : vector<8x128xbf16>, vector<128x128xbf16>, vector<8x128xf32> -> vector<8x128xf32>
    %9 = vector.broadcast %1 : vector<1x128xf32> to vector<8x128xf32>
    %10 = arith.addf %8, %9 : vector<8x128xf32>
    %cst_5 = arith.constant 0.000000e+00 : f32
    %11 = vector.broadcast %cst_5 : f32 to vector<8x128xf32>
    %12 = arith.maximumf %10, %11 : vector<8x128xf32>
    %13 = arith.truncf %12 : vector<8x128xf32> to vector<8x128xbf16>
    %c0_6 = arith.constant 0 : index
    %c0_7 = arith.constant 0 : index
    %14 = vector.load %arg3[%c0_6, %c0_7] : memref<128x128xbf16, #tpu.memory_space<vmem>>, vector<128x128xbf16>
    %cst_8 = arith.constant dense<0.000000e+00> : vector<8x128xf32>
    %15 = tpu.matmul %13, %14, %cst_8 {dimension_numbers = #tpu.dot_dimension_numbers<[1], [0], [0], [1], [0, 0, 1, 1], [], []>} : vector<8x128xbf16>, vector<128x128xbf16>, vector<8x128xf32> -> vector<8x128xf32>
    %16 = vector.broadcast %2 : vector<1x128xf32> to vector<8x128xf32>
    %17 = arith.addf %15, %16 : vector<8x128xf32>
    %cst_9 = arith.constant dense<0.000000e+00> : vector<8xf32>
    %18 = vector.multi_reduction <add>, %17, %cst_9 [1] : vector<8x128xf32> to vector<8xf32>
    %19 = vector.shape_cast %18 : vector<8xf32> to vector<8x1xf32>
    %cst_10 = arith.constant 7.812500e-03 : f32
    %20 = vector.broadcast %cst_10 : f32 to vector<8x1xf32>
    %21 = arith.mulf %19, %20 : vector<8x1xf32>
    %22 = arith.mulf %17, %17 : vector<8x128xf32>
    %cst_11 = arith.constant dense<0.000000e+00> : vector<8xf32>
    %23 = vector.multi_reduction <add>, %22, %cst_11 [1] : vector<8x128xf32> to vector<8xf32>
    %24 = vector.shape_cast %23 : vector<8xf32> to vector<8x1xf32>
    %cst_12 = arith.constant 7.812500e-03 : f32
    %25 = vector.broadcast %cst_12 : f32 to vector<8x1xf32>
    %26 = arith.mulf %24, %25 : vector<8x1xf32>
    %27 = arith.mulf %21, %21 : vector<8x1xf32>
    %28 = arith.subf %26, %27 : vector<8x1xf32>
    %cst_13 = arith.constant 0.000000e+00 : f32
    %29 = vector.broadcast %cst_13 : f32 to vector<8x1xf32>
    %30 = arith.maximumf %28, %29 : vector<8x1xf32>
    %31 = vector.broadcast %21 : vector<8x1xf32> to vector<8x128xf32>
    %32 = arith.subf %17, %31 : vector<8x128xf32>
    %cst_14 = arith.constant 9.99999974E-6 : f32
    %33 = vector.broadcast %cst_14 : f32 to vector<8x1xf32>
    %34 = arith.addf %30, %33 : vector<8x1xf32>
    %35 = math.rsqrt %34 : vector<8x1xf32>
    %36 = vector.broadcast %35 : vector<8x1xf32> to vector<8x128xf32>
    %37 = arith.mulf %32, %36 : vector<8x128xf32>
    %38 = vector.broadcast %3 : vector<1x128xf32> to vector<8x128xf32>
    %39 = arith.mulf %37, %38 : vector<8x128xf32>
    %40 = vector.broadcast %4 : vector<1x128xf32> to vector<8x128xf32>
    %41 = arith.addf %39, %40 : vector<8x128xf32>
    %c0_15 = arith.constant 0 : index
    %c0_16 = arith.constant 0 : index
    %42 = vector.load %arg5[%c0_15, %c0_16] : memref<8x128xf32, #tpu.memory_space<vmem>>, vector<8x128xf32>
    tpu.vector_store %arg5[%c0_15, %c0_16], %41 {strides = array<i32>} : memref<8x128xf32, #tpu.memory_space<vmem>>, vector<8x128xf32>,
    return
  }
  func.func @transform_0(%arg0: i32) -> (i32, i32) {
    %c0_i32 = arith.constant 0 : i32
    %c0_i32_0 = arith.constant 0 : i32
    return %arg0, %c0_i32 : i32, i32
  }
  func.func @transform_1(%arg0: i32) -> (i32, i32) {
    %c0_i32 = arith.constant 0 : i32
    %c0_i32_0 = arith.constant 0 : i32
    %c0_i32_1 = arith.constant 0 : i32
    return %c0_i32, %c0_i32_0 : i32, i32
  }
  func.func @transform_2(%arg0: i32) -> (i32, i32) {
    %c0_i32 = arith.constant 0 : i32
    %c0_i32_0 = arith.constant 0 : i32
    %c0_i32_1 = arith.constant 0 : i32
    return %c0_i32, %c0_i32_0 : i32, i32
  }
  func.func @transform_3(%arg0: i32) -> (i32, i32) {
    %c0_i32 = arith.constant 0 : i32
    %c0_i32_0 = arith.constant 0 : i32
    %c0_i32_1 = arith.constant 0 : i32
    return %c0_i32, %c0_i32_0 : i32, i32
  }
  func.func @transform_4(%arg0: i32) -> (i32, i32) {
    %c0_i32 = arith.constant 0 : i32
    %c0_i32_0 = arith.constant 0 : i32
    return %arg0, %c0_i32 : i32, i32
  }
}

</mosaic_0001>

<llo_original>
// kernel: tpu_custom_call.1
$region0: #{tpu_custom_call.1}
  #allocation0 [shape = 'u32[]', space=smem, size = 0x4, offset = 0x4, fixed_abs, tag = 'smem constant byte address 0x4 - core index']
  #allocation1 [shape = 'u32[144,128]{1,0:T(1,128)}', space=vmem, size = 0x12000, scoped, tag = 'internal scratch']
  %s0 = inlined_call_operand.hbm [shape: f32[16,128], index: 0, kind: input, shape index: {}]
  %s1 = inlined_call_operand.hbm [shape: bf16[128,128], index: 1, kind: input, shape index: {}]
  %s2 = inlined_call_operand.hbm [shape: bf16[128,128], index: 2, kind: input, shape index: {}]
  %s3 = inlined_call_operand.vmem [shape: f32[4,128], index: 3, kind: input, shape index: {}]
  %s4 = inlined_call_operand.hbm [shape: f32[16,128], index: 4, kind: output, shape index: {}]
  %s5 = sld [smem:[#allocation0]]
  $region61: #{tpu_custom_call.1} parent=0
    _
  %s7 = ssub.s32 1, %s5
  %s8 = scalar_select 0, %s7, %s5
  $region1: #{tpu_custom_call.1} parent=0
    #allocation2 [shape = 'u8[8192]{0}', space=vmem, size = 0x2000, scoped, tag = 'input window, operand 0']
    #allocation3 [shape = 's32[2]{0}', space=sflag, size = 0x8, scoped, tag = 'scoped memory for tpu_custom_call.1']
    #allocation4 [shape = 's32[2]{0}', space=sflag, size = 0x8, scoped, tag = 'scoped memory for tpu_custom_call.1']
    #allocation5 [shape = 'u8[32768]{0}', space=vmem, size = 0x8000, scoped, tag = 'input window, operand 1, single buffered']
    #allocation6 [shape = 's32[1]{0}', space=sflag, size = 0x4, scoped, tag = 'scoped memory for tpu_custom_call.1']
    #allocation7 [shape = 'u8[32768]{0}', space=vmem, size = 0x8000, scoped, tag = 'input window, operand 2, single buffered']
    #allocation8 [shape = 'u8[8192]{0}', space=vmem, size = 0x2000, scoped, tag = 'output window, operand 0']
    %9 = vsyncpa [#allocation3], 0
    %s10 = scalar_lea.sflag [#allocation3], 1
    %11 = vsyncpa %s10, 0
    %12 = vsyncpa [#allocation6], 0
    %13 = vsyncpa [#allocation4], 0
    %s14 = scalar_lea.sflag [#allocation4], 1
    %15 = vsyncpa %s14, 0
    loop: start=0, step=1, limit=4
    $region2: #{tpu_custom_call.1} parent=1 // loop_pre_header
      _
    $region3: #{tpu_custom_call.1} parent=1 // loop_header
      %s17 = sphi 0, %s21
      %p18 = scmp.ge.s32.totalorder %s17, 4
      %s27 = sphi 0, %s29
      %s30 = sphi 0, %s27
      %s31 = sphi 0, %s30
      %s47 = sphi 0, %s31
      %s51 = sphi 0, %s51
      %s53 = sphi 0, %s51
      %s54 = sphi 0, %s53
      %s68 = sphi 0, %s54
      %s72 = sphi 0, %s72
      %s74 = sphi 0, %s72
      %s75 = sphi 0, %s74
      %s89 = sphi 0, %s75
      %s93 = sphi 0, %s93
      %s95 = sphi 0, %s93
      %s96 = sphi 0, %s95
      %s110 = sphi 0, %s96
      %s116 = sphi 0, %s118
      %s119 = sphi 0, %s116
      %s120 = sphi 0, %s119
      %s136 = sphi 0, %s120
    $region4: #{tpu_custom_call.1} parent=1 // loop_header_branch
      %20 = sbr.rel (%p18) target = $region8
    $region5: #{tpu_custom_call.1} parent=1 // loop_body
      %s22 = ssub.s32 %s17, 1
      %s23 = ssub.s32 %s17, 2
      %s24 = sadd.s32 %s17, 1
      %s25 = ssub.s32 %s17, %s24
      %p26 = scmp.eq.s32.totalorder %s25, 0
      %s28 = sadd.s32 %s27, 1
      %s29 = scalar_select %p26, %s27, %s28
      %p32 = pneg %p26
      %p33 = scmp.eq.s32.totalorder %s17, 1
      %p34 = por %p32, %p33
      %p35 = scmp.ne.s32.totalorder %s27, %s30
      %p36 = scmp.eq.s32.totalorder %s17, 0
      %p37 = por %p35, %p36
      %p38 = scmp.ne.s32.totalorder %s27, %s30
      %p39 = scmp.eq.s32.totalorder %s22, 1
      %p40 = por %p38, %p39
      %p41 = scmp.ne.s32.totalorder %s30, %s31
      %p42 = scmp.eq.s32.totalorder %s22, 0
      %p43 = por %p41, %p42
      %p44 = scmp.ne.s32.totalorder %s30, %s31
      %p45 = scmp.eq.s32.totalorder %s23, 1
      %p46 = por %p44, %p45
      %p48 = scmp.ne.s32.totalorder %s31, %s47
      %p49 = scmp.eq.s32.totalorder %s23, 0
      %p50 = por %p48, %p49
      %s52 = sadd.s32 %s51, 1
      %p55 = scmp.eq.s32.totalorder %s17, 1
      %p56 = scmp.ne.s32.totalorder %s51, %s53
      %p57 = scmp.eq.s32.totalorder %s17, 0
      %p58 = por %p56, %p57
      %p59 = scmp.ne.s32.totalorder %s51, %s53
      %p60 = scmp.eq.s32.totalorder %s22, 1
      %p61 = por %p59, %p60
      %p62 = scmp.ne.s32.totalorder %s53, %s54
      %p63 = scmp.eq.s32.totalorder %s22, 0
      %p64 = por %p62, %p63
      %p65 = scmp.ne.s32.totalorder %s53, %s54
      %p66 = scmp.eq.s32.totalorder %s23, 1
      %p67 = por %p65, %p66
      %p69 = scmp.ne.s32.totalorder %s54, %s68
      %p70 = scmp.eq.s32.totalorder %s23, 0
      %p71 = por %p69, %p70
      %s73 = sadd.s32 %s72, 1
      %p76 = scmp.eq.s32.totalorder %s17, 1
      %p77 = scmp.ne.s32.totalorder %s72, %s74
      %p78 = scmp.eq.s32.totalorder %s17, 0
      %p79 = por %p77, %p78
      %p80 = scmp.ne.s32.totalorder %s72, %s74
      %p81 = scmp.eq.s32.totalorder %s22, 1
      %p82 = por %p80, %p81
      %p83 = scmp.ne.s32.totalorder %s74, %s75
      %p84 = scmp.eq.s32.totalorder %s22, 0
      %p85 = por %p83, %p84
      %p86 = scmp.ne.s32.totalorder %s74, %s75
      %p87 = scmp.eq.s32.totalorder %s23, 1
      %p88 = por %p86, %p87
      %p90 = scmp.ne.s32.totalorder %s75, %s89
      %p91 = scmp.eq.s32.totalorder %s23, 0
      %p92 = por %p90, %p91
      %s94 = sadd.s32 %s93, 1
      %p97 = scmp.eq.s32.totalorder %s17, 1
      %p98 = scmp.ne.s32.totalorder %s93, %s95
      %p99 = scmp.eq.s32.totalorder %s17, 0
      %p100 = por %p98, %p99
      %p101 = scmp.ne.s32.totalorder %s93, %s95
      %p102 = scmp.eq.s32.totalorder %s22, 1
      %p103 = por %p101, %p102
      %p104 = scmp.ne.s32.totalorder %s95, %s96
      %p105 = scmp.eq.s32.totalorder %s22, 0
      %p106 = por %p104, %p105
      %p107 = scmp.ne.s32.totalorder %s95, %s96
      %p108 = scmp.eq.s32.totalorder %s23, 1
      %p109 = por %p107, %p108
      %p111 = scmp.ne.s32.totalorder %s96, %s110
      %p112 = scmp.eq.s32.totalorder %s23, 0
      %p113 = por %p111, %p112
      %s114 = ssub.s32 %s17, %s24
      %p115 = scmp.eq.s32.totalorder %s114, 0
      %s117 = sadd.s32 %s116, 1
      %s118 = scalar_select %p115, %s116, %s117
      %p121 = pneg %p115
      %p122 = scmp.eq.s32.totalorder %s17, 1
      %p123 = por %p121, %p122
      %p124 = scmp.ne.s32.totalorder %s116, %s119
      %p125 = scmp.eq.s32.totalorder %s17, 0
      %p126 = por %p124, %p125
      %p127 = scmp.ne.s32.totalorder %s116, %s119
      %p128 = scmp.eq.s32.totalorder %s22, 1
      %p129 = por %p127, %p128
      %p130 = scmp.ne.s32.totalorder %s119, %s120
      %p131 = scmp.eq.s32.totalorder %s22, 0
      %p132 = por %p130, %p131
      %p133 = scmp.ne.s32.totalorder %s119, %s120
      %p134 = scmp.eq.s32.totalorder %s23, 1
      %p135 = por %p133, %p134
      %p137 = scmp.ne.s32.totalorder %s120, %s136
      %p138 = scmp.eq.s32.totalorder %s23, 0
      %p139 = por %p137, %p138
      %p140 = scmp.le.s32.totalorder 1, %s17
      %p141 = scmp.lt.s32.totalorder %s17, 3
      %p142 = pnand %p140, %p141
      %p143 = pneg %p142
      // Predicated region
      $region9: #{tpu_custom_call.1} parent=5 // pred_check
        _
      $region10: #{tpu_custom_call.1} parent=5 // pred_check_branch
        %145 = sbr.rel (%p142) target = $region12
      $region11: #{tpu_custom_call.1} parent=5 // pred_region
        %s146 = ssub.s32 %s17, 1
        // Predicated region
        $region13: #{tpu_custom_call.1} parent=11 // pred_check
          %p147 = pneg %p64
        $region14: #{tpu_custom_call.1} parent=11 // pred_check_branch
          %149 = sbr.rel (%p147) target = $region16
        $region15: #{tpu_custom_call.1} parent=11 // pred_region
          %s151 = ssub.s32 1024, 1024
          %152 = vsyncadd [#allocation6], %s151
          %s153 = sshll.u32 [#allocation5], 4
          %s154 = int_to_ptr.vmem [resolvable:$true] %s153
          %159 = dma.hbm_to_vmem [thread:$0]  %s1, 1024, %s154, [#allocation6], 64, 64, 4
        $region16: #{tpu_custom_call.1} parent=11 // pred_fallthru
          _
        // Predicated region
        $region17: #{tpu_custom_call.1} parent=11 // pred_check
          %p160 = pneg %p85
        $region18: #{tpu_custom_call.1} parent=11 // pred_check_branch
          %162 = sbr.rel (%p160) target = $region20
        $region19: #{tpu_custom_call.1} parent=11 // pred_region
          %s164 = ssub.s32 1024, 1024
          %165 = vsyncadd [#allocation6], %s164
          %s166 = sshll.u32 [#allocation7], 4
          %s167 = int_to_ptr.vmem [resolvable:$true] %s166
          %172 = dma.hbm_to_vmem [thread:$0]  %s2, 1024, %s167, [#allocation6], 64, 64, 4
        $region20: #{tpu_custom_call.1} parent=11 // pred_fallthru
          _
        // Predicated region
        $region21: #{tpu_custom_call.1} parent=11 // pred_check
          %p173 = pneg %p106
        $region22: #{tpu_custom_call.1} parent=11 // pred_check_branch
          %175 = sbr.rel (%p173) target = $region24
        $region23: #{tpu_custom_call.1} parent=11 // pred_region
          _
        $region24: #{tpu_custom_call.1} parent=11 // pred_fallthru
          _
      $region12: #{tpu_custom_call.1} parent=5 // pred_fallthru
        _
      %p176 = scmp.lt.s32.totalorder %s17, 2
      // Predicated region
      $region25: #{tpu_custom_call.1} parent=5 // pred_check
        %p177 = pneg %p176
      $region26: #{tpu_custom_call.1} parent=5 // pred_check_branch
        %179 = sbr.rel (%p177) target = $region28
      $region27: #{tpu_custom_call.1} parent=5 // pred_region
        // Predicated region
        $region29: #{tpu_custom_call.1} parent=27 // pred_check
          %p180 = pneg %p37
        $region30: #{tpu_custom_call.1} parent=27 // pred_check_branch
          %182 = sbr.rel (%p180) target = $region32
        $region31: #{tpu_custom_call.1} parent=27 // pred_region
          %s183 = sand.u32 %s27, 1
          %s184 = scalar_lea.sflag [#allocation3], %s183
          %s185 = sand.u32 %s27, 1
          %s186 = smul.addr %s185, 8
          %s187 = scalar_lea.vmem [#allocation2], %s186
          %s189 = ssub.s32 128, 128
          %190 = vsyncadd %s184, %s189
          %s191 = smul.addr %s17, 128
          %s192 = scalar_lea.hbm %s0, %s191
          %s194 = sshll.u32 %s187, 4
          %s195 = int_to_ptr.vmem [resolvable:$true] %s194
          %197 = dma.hbm_to_vmem [thread:$0]  %s192, 128, %s195, %s184
        $region32: #{tpu_custom_call.1} parent=27 // pred_fallthru
          _
      $region28: #{tpu_custom_call.1} parent=5 // pred_fallthru
        _
      %p198 = scmp.le.s32.totalorder 1, %s17
      %p199 = scmp.lt.s32.totalorder %s17, 3
      %p200 = pnand %p198, %p199
      %p201 = pneg %p200
      // Predicated region
      $region33: #{tpu_custom_call.1} parent=5 // pred_check
        _
      $region34: #{tpu_custom_call.1} parent=5 // pred_check_branch
        %203 = sbr.rel (%p200) target = $region36
      $region35: #{tpu_custom_call.1} parent=5 // pred_region
        %s204 = ssub.s32 %s17, 1
        %s205 = sand.u32 %s30, 1
        %s206 = scalar_lea.sflag [#allocation3], %s205
        %s207 = sand.u32 %s30, 1
        %s208 = smul.addr %s207, 8
        %s209 = scalar_lea.vmem [#allocation2], %s208
        // Predicated region
        $region37: #{tpu_custom_call.1} parent=35 // pred_check
          %p210 = pneg %p43
        $region38: #{tpu_custom_call.1} parent=35 // pred_check_branch
          %212 = sbr.rel (%p210) target = $region40
        $region39: #{tpu_custom_call.1} parent=35 // pred_region
          %213 = dma.done %s206, 128
        $region40: #{tpu_custom_call.1} parent=35 // pred_fallthru
          _
        // Predicated region
        $region41: #{tpu_custom_call.1} parent=35 // pred_check
          %p214 = pneg %p64
        $region42: #{tpu_custom_call.1} parent=35 // pred_check_branch
          %216 = sbr.rel (%p214) target = $region44
        $region43: #{tpu_custom_call.1} parent=35 // pred_region
          %217 = dma.done [#allocation6], 1024
        $region44: #{tpu_custom_call.1} parent=35 // pred_fallthru
          _
        // Predicated region
        $region45: #{tpu_custom_call.1} parent=35 // pred_check
          %p218 = pneg %p85
        $region46: #{tpu_custom_call.1} parent=35 // pred_check_branch
          %220 = sbr.rel (%p218) target = $region48
        $region47: #{tpu_custom_call.1} parent=35 // pred_region
          %221 = dma.done [#allocation6], 1024
        $region48: #{tpu_custom_call.1} parent=35 // pred_fallthru
          _
        %s222 = sand.u32 %s30, 1
        %s223 = scalar_lea.sflag [#allocation3], %s222
        %s224 = sand.u32 %s30, 1
        %s225 = smul.addr %s224, 8
        %s226 = scalar_lea.vmem [#allocation2], %s225
        %p227 = pneg %p43
        %p228 = pneg %p40
        %p229 = pneg %p64
        %p230 = pneg %p61
        %p231 = pneg %p85
        %p232 = pneg %p82
        %p233 = pneg %p106
        %p234 = pneg %p103
        %p235 = pneg %p132
        %p236 = pneg %p129
        %s237 = sand.u32 %s119, 1
        %s238 = scalar_lea.sflag [#allocation4], %s237
        %s239 = sand.u32 %s119, 1
        %s240 = smul.addr %s239, 8
        %s241 = scalar_lea.vmem [#allocation8], %s240
        %v243 = vld [vmem:[%s3] sm:$0xf]
        %v244 = vld [vmem:[%s209] sm:$0xff]
        %v245 = vpack.c.bf16 %v244, %v244
        %v246 = vld [vmem:[#allocation5] sm:$0xf]
        %v247 = vld [vmem:[#allocation5 + $0x4] sm:$0xf]
        %v248 = vld [vmem:[#allocation5 + $0x8] sm:$0xf]
        %v249 = vld [vmem:[#allocation5 + $0xc] sm:$0xf]
        %v250 = vld [vmem:[#allocation5 + $0x10] sm:$0xf]
        %v251 = vld [vmem:[#allocation5 + $0x14] sm:$0xf]
        %v252 = vld [vmem:[#allocation5 + $0x18] sm:$0xf]
        %v253 = vld [vmem:[#allocation5 + $0x1c] sm:$0xf]
        %v254 = vld [vmem:[#allocation5 + $0x20] sm:$0xf]
        %v255 = vld [vmem:[#allocation5 + $0x24] sm:$0xf]
        %v256 = vld [vmem:[#allocation5 + $0x28] sm:$0xf]
        %v257 = vld [vmem:[#allocation5 + $0x2c] sm:$0xf]
        %v258 = vld [vmem:[#allocation5 + $0x30] sm:$0xf]
        %v259 = vld [vmem:[#allocation5 + $0x34] sm:$0xf]
        %v260 = vld [vmem:[#allocation5 + $0x38] sm:$0xf]
        %v261 = vld [vmem:[#allocation5 + $0x3c] sm:$0xf]
        %v262 = vlaneseq
        %v263 = vshrl.u32 %v262, 7
        %v264 = vsub.s32 0, %v263
        %v265 = vrot.slane %v243, %v264
        %v282 = vunpack.c.l.b16 %v246
        %v283 = vunpack.c.l.b16 %v247
        %v284 = vunpack.c.l.b16 %v248
        %v285 = vunpack.c.l.b16 %v249
        %v286 = vunpack.c.l.b16 %v250
        %v287 = vunpack.c.l.b16 %v251
        %v288 = vunpack.c.l.b16 %v252
        %v289 = vunpack.c.l.b16 %v253
        %v290 = vunpack.c.l.b16 %v254
        %v291 = vunpack.c.l.b16 %v255
        %v292 = vunpack.c.l.b16 %v256
        %v293 = vunpack.c.l.b16 %v257
        %v294 = vunpack.c.l.b16 %v258
        %v295 = vunpack.c.l.b16 %v259
        %v296 = vunpack.c.l.b16 %v260
        %v297 = vunpack.c.l.b16 %v261
        %v298 = vpack.c.b16 %v283, %v282
        %v299 = vpack.c.b16 %v285, %v284
        %v300 = vpack.c.b16 %v287, %v286
        %v301 = vpack.c.b16 %v289, %v288
        %v302 = vpack.c.b16 %v291, %v290
        %v303 = vpack.c.b16 %v293, %v292
        %v304 = vpack.c.b16 %v295, %v294
        %v305 = vpack.c.b16 %v297, %v296
        %314 = vmatprep.subr.bf16.mxu0 0
        %315 = vmatpush1.bf16.msra.mxu0 %v305
        %316 = vmatprep.subr.bf16.mxu0 0
        %317 = vmatpush1.bf16.msra.mxu0 %v304
        %318 = vmatprep.subr.bf16.mxu0 0
        %319 = vmatpush1.bf16.msra.mxu0 %v303
        %320 = vmatprep.subr.bf16.mxu0 0
        %321 = vmatpush1.bf16.msra.mxu0 %v302
        %322 = vmatprep.subr.bf16.mxu0 0
        %323 = vmatpush1.bf16.msra.mxu0 %v301
        %324 = vmatprep.subr.bf16.mxu0 0
        %325 = vmatpush1.bf16.msra.mxu0 %v300
        %326 = vmatprep.subr.bf16.mxu0 0
        %327 = vmatpush1.bf16.msra.mxu0 %v299
        %328 = vmatprep.subr.bf16.mxu0 0
        %329 = vmatpush1.bf16.msra.mxu0 %v298
        %330 = vmatprep.subr.bf16.mxu0 0
        %331 = vmatpush2.bf16.msra.mxu0 0
        %332 = vmatprep.subr.bf16.mxu0 0
        %333 = vmatpush2.bf16.msra.mxu0 0
        %334 = vmatprep.subr.bf16.mxu0 0
        %335 = vmatpush2.bf16.msra.mxu0 0
        %336 = vmatprep.subr.bf16.mxu0 0
        %337 = vmatpush2.bf16.msra.mxu0 0
        %338 = vmatprep.subr.bf16.mxu0 0
        %339 = vmatpush2.bf16.msra.mxu0 0
        %340 = vmatprep.subr.bf16.mxu0 0
        %341 = vmatpush2.bf16.msra.mxu0 0
        %342 = vmatprep.subr.bf16.mxu0 0
        %343 = vmatpush2.bf16.msra.mxu0 0
        %344 = vmatprep.subr.bf16.mxu0 0
        %345 = vmatpush2.bf16.msra.mxu0 0
        %346 = vmatprep.mubr.bf16.mxu0 0
        %347 = vmatmul.mubr.bf16.gmra.mxu0 %v245
        %v348 = vpop.f32.mrf.mxu0
        %v349 = vadd.f32 %v265, %v348
        %v350 = vpop.f32.mrf.mxu0
        %v351 = vpop.f32.mrf.mxu0
        %v352 = vpop.f32.mrf.mxu0
        %353 = vdwg.mxu0
        %v354 = vmax.f32 %v349, 0.0
        %v355 = vpack.c.bf16 %v354, %v354
        %v356 = vld [vmem:[#allocation7] sm:$0xf]
        %v357 = vld [vmem:[#allocation7 + $0x4] sm:$0xf]
        %v358 = vld [vmem:[#allocation7 + $0x8] sm:$0xf]
        %v359 = vld [vmem:[#allocation7 + $0xc] sm:$0xf]
        %v360 = vld [vmem:[#allocation7 + $0x10] sm:$0xf]
        %v361 = vld [vmem:[#allocation7 + $0x14] sm:$0xf]
        %v362 = vld [vmem:[#allocation7 + $0x18] sm:$0xf]
        %v363 = vld [vmem:[#allocation7 + $0x1c] sm:$0xf]
        %v364 = vld [vmem:[#allocation7 + $0x20] sm:$0xf]
        %v365 = vld [vmem:[#allocation7 + $0x24] sm:$0xf]
        %v366 = vld [vmem:[#allocation7 + $0x28] sm:$0xf]
        %v367 = vld [vmem:[#allocation7 + $0x2c] sm:$0xf]
        %v368 = vld [vmem:[#allocation7 + $0x30] sm:$0xf]
        %v369 = vld [vmem:[#allocation7 + $0x34] sm:$0xf]
        %v370 = vld [vmem:[#allocation7 + $0x38] sm:$0xf]
        %v371 = vld [vmem:[#allocation7 + $0x3c] sm:$0xf]
        %v372 = vlaneseq
        %v373 = vshrl.u32 %v372, 7
        %v374 = vsub.s32 1, %v373
        %v375 = vrot.slane %v243, %v374
        %v392 = vunpack.c.l.b16 %v356
        %v393 = vunpack.c.l.b16 %v357
        %v394 = vunpack.c.l.b16 %v358
        %v395 = vunpack.c.l.b16 %v359
        %v396 = vunpack.c.l.b16 %v360
        %v397 = vunpack.c.l.b16 %v361
        %v398 = vunpack.c.l.b16 %v362
        %v399 = vunpack.c.l.b16 %v363
        %v400 = vunpack.c.l.b16 %v364
        %v401 = vunpack.c.l.b16 %v365
        %v402 = vunpack.c.l.b16 %v366
        %v403 = vunpack.c.l.b16 %v367
        %v404 = vunpack.c.l.b16 %v368
        %v405 = vunpack.c.l.b16 %v369
        %v406 = vunpack.c.l.b16 %v370
        %v407 = vunpack.c.l.b16 %v371
        %v408 = vpack.c.b16 %v393, %v392
        %v409 = vpack.c.b16 %v395, %v394
        %v410 = vpack.c.b16 %v397, %v396
        %v411 = vpack.c.b16 %v399, %v398
        %v412 = vpack.c.b16 %v401, %v400
        %v413 = vpack.c.b16 %v403, %v402
        %v414 = vpack.c.b16 %v405, %v404
        %v415 = vpack.c.b16 %v407, %v406
        %424 = vmatprep.subr.bf16.mxu0 0
        %425 = vmatpush1.bf16.msra.mxu0 %v415
        %426 = vmatprep.subr.bf16.mxu0 0
        %427 = vmatpush1.bf16.msra.mxu0 %v414
        %428 = vmatprep.subr.bf16.mxu0 0
        %429 = vmatpush1.bf16.msra.mxu0 %v413
        %430 = vmatprep.subr.bf16.mxu0 0
        %431 = vmatpush1.bf16.msra.mxu0 %v412
        %432 = vmatprep.subr.bf16.mxu0 0
        %433 = vmatpush1.bf16.msra.mxu0 %v411
        %434 = vmatprep.subr.bf16.mxu0 0
        %435 = vmatpush1.bf16.msra.mxu0 %v410
        %436 = vmatprep.subr.bf16.mxu0 0
        %437 = vmatpush1.bf16.msra.mxu0 %v409
        %438 = vmatprep.subr.bf16.mxu0 0
        %439 = vmatpush1.bf16.msra.mxu0 %v408
        %440 = vmatprep.subr.bf16.mxu0 0
        %441 = vmatpush2.bf16.msra.mxu0 0
        %442 = vmatprep.subr.bf16.mxu0 0
        %443 = vmatpush2.bf16.msra.mxu0 0
        %444 = vmatprep.subr.bf16.mxu0 0
        %445 = vmatpush2.bf16.msra.mxu0 0
        %446 = vmatprep.subr.bf16.mxu0 0
        %447 = vmatpush2.bf16.msra.mxu0 0
        %448 = vmatprep.subr.bf16.mxu0 0
        %449 = vmatpush2.bf16.msra.mxu0 0
        %450 = vmatprep.subr.bf16.mxu0 0
        %451 = vmatpush2.bf16.msra.mxu0 0
        %452 = vmatprep.subr.bf16.mxu0 0
        %453 = vmatpush2.bf16.msra.mxu0 0
        %454 = vmatprep.subr.bf16.mxu0 0
        %455 = vmatpush2.bf16.msra.mxu0 0
        %456 = vmatprep.mubr.bf16.mxu0 0
        %457 = vmatmul.mubr.bf16.gmra.mxu0 %v355
        %v458 = vpop.f32.mrf.mxu0
        %v459 = vadd.f32 %v375, %v458
        %v460 = vpop.f32.mrf.mxu0
        %v461 = vpop.f32.mrf.mxu0
        %v462 = vpop.f32.mrf.mxu0
        %463 = vdwg.mxu0
        %464 = vadd.xlane.f32.xlu0 %v459
        %v465 = vpop.xlane.xlu0 %464
        %v466 = vmul.f32 %v465, 0.0078125
        %v467 = vmul.f32 %v459, %v459
        %468 = vadd.xlane.f32.xlu0 %v467
        %v469 = vpop.xlane.xlu0 %468
        %v470 = vmul.f32 %v469, 0.0078125
        %v471 = vmul.f32 %v466, %v466
        %v472 = vsub.f32 %v470, %v471
        %v473 = vmax.f32 %v472, 0.0
        %v474 = vsub.f32 %v459, %v466
        %v475 = vadd.f32 %v473, 1e-05
        %v476 = vrsqrt.pop %v475
        %v477 = vmul.f32 %v474, %v476
        %v478 = vlaneseq
        %v479 = vshrl.u32 %v478, 7
        %v480 = vsub.s32 2, %v479
        %v481 = vrot.slane %v243, %v480
        %v482 = vmul.f32 %v477, %v481
        %v483 = vlaneseq
        %v484 = vshrl.u32 %v483, 7
        %v485 = vsub.s32 3, %v484
        %v486 = vrot.slane %v243, %v485
        %v487 = vadd.f32 %v482, %v486
        %488 = vst [vmem:[%s241] sm:$0xff] %v487
        %s489 = sand.u32 %s119, 1
        %s490 = scalar_lea.sflag [#allocation4], %s489
        %s491 = sand.u32 %s119, 1
        %s492 = smul.addr %s491, 8
        %s493 = scalar_lea.vmem [#allocation8], %s492
        // Predicated region
        $region49: #{tpu_custom_call.1} parent=35 // pred_check
          %p494 = pneg %p129
        $region50: #{tpu_custom_call.1} parent=35 // pred_check_branch
          %496 = sbr.rel (%p494) target = $region52
        $region51: #{tpu_custom_call.1} parent=35 // pred_region
          %s498 = ssub.s32 128, 128
          %499 = vsyncadd %s490, %s498
          %s500 = smul.addr %s22, 128
          %s501 = scalar_lea.hbm %s4, %s500
          %s503 = sshll.u32 %s493, 4
          %s504 = int_to_ptr.vmem [resolvable:$true] %s503
          %506 = dma.vmem_to_hbm [thread:$0]  %s504, 128, %s501, %s490
        $region52: #{tpu_custom_call.1} parent=35 // pred_fallthru
          _
      $region36: #{tpu_custom_call.1} parent=5 // pred_fallthru
        _
      %p507 = scmp.le.s32.totalorder 2, %s17
      // Predicated region
      $region53: #{tpu_custom_call.1} parent=5 // pred_check
        %p508 = pneg %p507
      $region54: #{tpu_custom_call.1} parent=5 // pred_check_branch
        %510 = sbr.rel (%p508) target = $region56
      $region55: #{tpu_custom_call.1} parent=5 // pred_region
        %s511 = ssub.s32 %s17, 2
        // Predicated region
        $region57: #{tpu_custom_call.1} parent=55 // pred_check
          %p512 = pneg %p135
        $region58: #{tpu_custom_call.1} parent=55 // pred_check_branch
          %514 = sbr.rel (%p512) target = $region60
        $region59: #{tpu_custom_call.1} parent=55 // pred_region
          %s515 = sand.u32 %s120, 1
          %s516 = scalar_lea.sflag [#allocation4], %s515
          %s517 = sand.u32 %s120, 1
          %s518 = smul.addr %s517, 8
          %s519 = scalar_lea.vmem [#allocation8], %s518
          %520 = dma.done %s516, 128
        $region60: #{tpu_custom_call.1} parent=55 // pred_fallthru
          _
      $region56: #{tpu_custom_call.1} parent=5 // pred_fallthru
        _
    $region6: #{tpu_custom_call.1} parent=1 // loop_footer
      %s21 = sadd.s32 1, %s17
    $region7: #{tpu_custom_call.1} parent=1 // loop_footer_branch
      %16 = sbr.rel target = $region3
    $region8: #{tpu_custom_call.1} parent=1 // loop_exit
      _
    %521 = vsyncpa [#allocation3], 1
    %s522 = scalar_lea.sflag [#allocation3], 1
    %523 = vsyncpa %s522, 1
    %524 = vsyncpa [#allocation6], 1
    %525 = vsyncpa [#allocation4], 1
    %s526 = scalar_lea.sflag [#allocation4], 1
    %527 = vsyncpa %s526, 1

</llo_original>
